<compile_context>
chip_gen: v7x
topology: tpu7x:2x2x1
jax: 0.10.0
libtpu: 0.0.40
codegen_flags: <defaults>
</compile_context>

<pallas_src>
import collections
import functools

import jax
import jax.numpy as jnp
from jax.experimental import pallas as pl
from jax.experimental.pallas import tpu as pltpu

LEAKY_ALPHA = 0.05
VMEM_LIMIT_BYTES = 40 * 1024 * 1024   # <= 64 MiB v7x VMEM, fine on v5e/v6e
TM_MAX = 256                          # register-resident output tile rows
HEAD_PAD = 128                        # lane-dense width for 3-channel heads


# ----------------------------------------------------------------------------
# Pallas kernel: direct "same-size" 3-D convolution as a sum of tap-shifted
# (TM, Cin) x (Cin, Cout) matmuls over a flattened, padded spatial axis.
# ----------------------------------------------------------------------------
def _conv_tap_kernel(x_ref, w_ref, mask_ref, b_ref, o_ref, *,
                     starts, tm, alpha, center_tap, single_mtile):
    # x_ref   : (Mpad, Cin)      bf16  (full padded activation, this batch)
    # w_ref   : (T, Cin, Cout)   bf16
    # mask_ref: (TM, T)          f32   (boundary mask for this M tile)
    # b_ref   : (1, Cout)        f32
    # o_ref   : (TM, Cout)       out dtype (bf16 or f32)
    n_taps = w_ref.shape[0]
    cout = o_ref.shape[-1]

    if single_mtile:
        m0 = 0
    else:
        m0 = pl.program_id(1) * tm
        if tm % 8 == 0:
            m0 = pl.multiple_of(m0, 8)

    acc = jnp.zeros((tm, cout), jnp.float32)
    for t in range(n_taps):                       # static, unrolled tap loop
        start = starts[t] if single_mtile else m0 + starts[t]
        lhs = x_ref[pl.ds(start, tm), :]          # (TM, Cin) bf16
        part = jnp.dot(lhs, w_ref[t], preferred_element_type=jnp.float32)
        if t == center_tap:
            acc = acc + part                      # all-ones mask: skip multiply
        else:
            acc = acc + part * mask_ref[:, t:t + 1]
    y = acc + b_ref[...]
    if alpha is not None:
        y = jnp.where(y > 0.0, y, alpha * y)      # leaky ReLU (f32)
    o_ref[...] = y.astype(o_ref.dtype)


# ----------------------------------------------------------------------------
# Static conv geometry: kept taps, flat offsets, flat padding, boundary mask.
# ----------------------------------------------------------------------------
Geometry = collections.namedtuple("Geometry",
                                  ["kept", "offsets", "deltas", "pad", "mask"])


def make_geometry(spatial, per_dim_offsets):
    D, H, W = spatial
    sd, sh = H * W, W
    n1, n2 = len(per_dim_offsets[1]), len(per_dim_offsets[2])
    kept, offsets = [], []
    for i, od in enumerate(per_dim_offsets[0]):
        for j, oh in enumerate(per_dim_offsets[1]):
            for k, ow in enumerate(per_dim_offsets[2]):
                # keep only taps whose shifted window overlaps the volume
                if (-D < od < D) and (-H < oh < H) and (-W < ow < W):
                    kept.append((i * n1 + j) * n2 + k)
                    offsets.append((od, oh, ow))
    deltas = tuple(od * sd + oh * sh + ow for od, oh, ow in offsets)
    pad = max(abs(d) for d in deltas)
    dd, hh, ww = jnp.meshgrid(jnp.arange(D), jnp.arange(H), jnp.arange(W),
                              indexing="ij")
    dd, hh, ww = dd.reshape(-1), hh.reshape(-1), ww.reshape(-1)
    cols = []
    for od, oh, ow in offsets:
        cols.append((dd + od >= 0) & (dd + od < D)
                    & (hh + oh >= 0) & (hh + oh < H)
                    & (ww + ow >= 0) & (ww + ow < W))
    mask = jnp.stack(cols, axis=-1).astype(jnp.float32)       # (M, T)
    return Geometry(tuple(kept), tuple(offsets), deltas, pad, mask)


def select_taps(w, kept):
    if len(kept) == w.shape[0]:
        return w
    return jnp.take(w, jnp.asarray(kept, dtype=jnp.int32), axis=0)


def pad_m(x_flat, pad):
    """Zero-pad a flattened (B, M, C) activation along M by `pad` each side."""
    if pad == 0:
        return x_flat
    return jnp.pad(x_flat, ((0, 0), (pad, pad), (0, 0)))


def choose_tm(m):
    if m <= TM_MAX:
        return m
    for tm in range(TM_MAX, 0, -8):
        if m % tm == 0:
            return tm
    return m   # fall back to full M if no multiple-of-8 divisor exists


# ----------------------------------------------------------------------------
# Fused conv wrapper.
# ----------------------------------------------------------------------------
def conv3d_padded(x_pad, w, bias, geom, m, *, alpha, out_dtype):
    """x_pad: (B, Mpad, Cin) bf16 padded flat activation; w: (T, Cin, Cout)
    bf16 (taps already selected to geom.kept); bias: (1, Cout) f32.
    Returns (B, m, Cout) in out_dtype."""
    B, Mpad, Cin = (int(s) for s in x_pad.shape)
    T, _, Cout = (int(s) for s in w.shape)
    assert Mpad == m + 2 * geom.pad
    starts = tuple(geom.pad + d for d in geom.deltas)
    tm = choose_tm(m)
    n_mt = m // tm
    center = geom.offsets.index((0, 0, 0)) if (0, 0, 0) in geom.offsets else -1

    kernel = functools.partial(
        _conv_tap_kernel, starts=starts, tm=tm, alpha=alpha,
        center_tap=center, single_mtile=(n_mt == 1))

    flops = 2 * B * m * T * Cin * Cout
    bytes_accessed = int(B * Mpad * Cin * 2 + T * Cin * Cout * 2 + m * T * 4
                         + Cout * 4
                         + B * m * Cout * jnp.dtype(out_dtype).itemsize)

    out = pl.pallas_call(
        kernel,
        out_shape=jax.ShapeDtypeStruct((B, m, Cout), out_dtype),
        grid_spec=pltpu.PrefetchScalarGridSpec(
            num_scalar_prefetch=0,
            grid=(B, n_mt),
            in_specs=[
                pl.BlockSpec((None, Mpad, Cin), lambda b, i: (b, 0, 0)),
                pl.BlockSpec((T, Cin, Cout), lambda b, i: (0, 0, 0)),
                pl.BlockSpec((tm, T), lambda b, i: (i, 0)),
                pl.BlockSpec((1, Cout), lambda b, i: (0, 0)),
            ],
            out_specs=pl.BlockSpec((None, tm, Cout), lambda b, i: (b, i, 0)),
        ),
        compiler_params=pltpu.CompilerParams(
            dimension_semantics=("parallel", "parallel"),
            vmem_limit_bytes=VMEM_LIMIT_BYTES),
        cost_estimate=pl.CostEstimate(flops=flops, transcendentals=0,
                                      bytes_accessed=bytes_accessed),
    )(x_pad, w, geom.mask, bias)
    return out


# ----------------------------------------------------------------------------
# ConvTranspose3d(k=4, stride=2, pad=1): 8 sub-pixel parity phases fused into
# a single conv with an 8*C-channel output; phases are interleaved in JAX.
# ----------------------------------------------------------------------------
_PHASE_TAP_IDX = {0: (0, 2), 1: (1, 3)}
_PHASE_OFFSETS = {0: (-1, 0), 1: (0, 1)}


def context_upsample(context_pad, w_fused_sel, bias8, geom, spatial):
    D, H, W = spatial
    m = D * H * W
    c8 = int(bias8.shape[-1])
    c = c8 // 8
    up = conv3d_padded(context_pad, w_fused_sel, bias8, geom, m,
                       alpha=None, out_dtype=jnp.bfloat16)      # (B, m, 8C)
    B = up.shape[0]
    up = up.reshape(B, D, H, W, 2, 2, 2, c)
    up = jnp.transpose(up, (0, 1, 4, 2, 5, 3, 6, 7))            # (B,D,2,H,2,W,2,C)
    return up.reshape(B, 2 * D, 2 * H, 2 * W, c)


# ----------------------------------------------------------------------------
# rrn_utils re-implementations (3D, channels-last), plain-JAX glue.
# ----------------------------------------------------------------------------
def normalize_features(feature_list):
    dims = (1, 2, 3, 4)
    means = [jnp.mean(f, axis=dims, keepdims=True) for f in feature_list]
    variances = [jnp.var(f, axis=dims, keepdims=True) for f in feature_list]
    mean = sum(means) / len(means)
    var = sum(variances) / len(variances)
    std = jnp.sqrt(var + 1e-16)
    return [(f - mean) / std for f in feature_list]


def compute_cost_volume(f1, f2, max_disp=2):
    B, D, H, W, C = f1.shape
    p = max_disp
    f2p = jnp.pad(f2, ((0, 0), (p, p), (p, p), (p, p), (0, 0)))
    cvs = []
    for di in range(2 * p + 1):
        for dj in range(2 * p + 1):
            for dk in range(2 * p + 1):
                sl = f2p[:, di:di + D, dj:dj + H, dk:dk + W, :]
                cvs.append(jnp.mean(f1 * sl, axis=-1))
    return jnp.stack(cvs, axis=-1)                    # (B,D,H,W,125)


def flow_to_warp(flow):
    B, D, H, W, _ = flow.shape
    gd, gh, gw = jnp.meshgrid(
        jnp.arange(D, dtype=jnp.float32),
        jnp.arange(H, dtype=jnp.float32),
        jnp.arange(W, dtype=jnp.float32), indexing="ij")
    grid = jnp.stack([gd, gh, gw], axis=-1)[None]
    return grid + flow


def resample(feat, warp):
    # TODO(synk): rrn_utils.resample boundary handling unverified; trilinear
    # sampling with edge clamping used here.
    B, D, H, W, C = feat.shape
    d, h, w = warp[..., 0], warp[..., 1], warp[..., 2]
    d0, h0, w0 = jnp.floor(d), jnp.floor(h), jnp.floor(w)
    fd, fh, fw = d - d0, h - h0, w - w0
    bidx = jnp.arange(B).reshape(B, 1, 1, 1)
    out = jnp.zeros((B, D, H, W, C), feat.dtype)
    for dd in (0, 1):
        for hh in (0, 1):
            for ww in (0, 1):
                di = jnp.clip(d0 + dd, 0, D - 1).astype(jnp.int32)
                hi = jnp.clip(h0 + hh, 0, H - 1).astype(jnp.int32)
                wi = jnp.clip(w0 + ww, 0, W - 1).astype(jnp.int32)
                wgt = ((fd if dd else 1 - fd) *
                       (fh if hh else 1 - fh) *
                       (fw if ww else 1 - fw))
                out = out + wgt[..., None] * feat[bidx, di, hi, wi]
    return out


def upsample(x, is_flow=True):
    # TODO(synk): jax.image.resize trilinear != F.interpolate align_corners
    # semantics exactly; acceptable for the synthetic-weight forward.
    B, D, H, W, C = x.shape
    up = jax.image.resize(x, (B, 2 * D, 2 * H, 2 * W, C), method="trilinear")
    return up * 2.0 if is_flow else up


# ----------------------------------------------------------------------------
# Parameter init (deterministic synthetic; PyTorch-like uniform bounds).
# Weights are stored tap-major (27, Cin, Cout), bf16, already merged per conv.
# ----------------------------------------------------------------------------
def _init_conv(key, k, cin, cout, cout_pad=None):
    bound = 1.0 / float(k ** 3 * cin) ** 0.5
    wkey, bkey = jax.random.split(key)
    w = jax.random.uniform(wkey, (k ** 3, cin, cout), jnp.float32,
                           minval=-bound, maxval=bound)
    b = jax.random.uniform(bkey, (cout,), jnp.float32,
                           minval=-bound, maxval=bound)
    if cout_pad is not None and cout_pad > cout:
        w = jnp.pad(w, ((0, 0), (0, 0), (0, cout_pad - cout)))
        b = jnp.pad(b, ((0, cout_pad - cout),))
    return w.astype(jnp.bfloat16), b.reshape(1, -1)


def _init_transpose_conv_fused(key, c):
    # TODO(synk): real PyTorch ConvTranspose3d weights would need flipping /
    # transposition before this equivalent-conv form; fine for synthetic init.
    bound = 1.0 / float(4 ** 3 * c) ** 0.5
    wkey, bkey = jax.random.split(key)
    w4 = jax.random.uniform(wkey, (4, 4, 4, c, c), jnp.float32,
                            minval=-bound, maxval=bound)
    b = jax.random.uniform(bkey, (c,), jnp.float32, minval=-bound, maxval=bound)
    zero = jnp.zeros((c, c), jnp.float32)
    taps = []
    for od in (-1, 0, 1):
        for oh in (-1, 0, 1):
            for ow in (-1, 0, 1):
                cols = []
                for pidx in range(8):
                    bd, bh, bw = (pidx >> 2) & 1, (pidx >> 1) & 1, pidx & 1
                    offs_d, offs_h, offs_w = (_PHASE_OFFSETS[bd],
                                              _PHASE_OFFSETS[bh],
                                              _PHASE_OFFSETS[bw])
                    if od in offs_d and oh in offs_h and ow in offs_w:
                        a = _PHASE_TAP_IDX[bd][offs_d.index(od)]
                        e = _PHASE_TAP_IDX[bh][offs_h.index(oh)]
                        f = _PHASE_TAP_IDX[bw][offs_w.index(ow)]
                        cols.append(w4[a, e, f])
                    else:
                        cols.append(zero)
                taps.append(jnp.concatenate(cols, axis=-1))   # (c, 8c)
    w_fused = jnp.stack(taps, axis=0).astype(jnp.bfloat16)    # (27, c, 8c)
    b8 = jnp.tile(b, (8,)).reshape(1, 8 * c)
    return w_fused, b8


def init_params(key, num_levels=4, num_ctx=32):
    input_feat_shape = [196, 128, 96, 64, 32, 16][::-1][:num_levels]
    block_layers = [128, 128, 96, 64, 32]
    cnt = [0]

    def nk():
        cnt[0] += 1
        return jax.random.fold_in(key, cnt[0])

    flow_layers = []
    for i in range(num_levels):
        if i == num_levels - 1:
            cin = 125 + input_feat_shape[i]
        else:
            cin = num_ctx + 3 + 125 + input_feat_shape[i]
        blocks = []
        for c in block_layers:
            blocks.append(_init_conv(nk(), 3, cin, c))
            cin += c
        head = _init_conv(nk(), 3, block_layers[-1], 3, cout_pad=HEAD_PAD)
        flow_layers.append(dict(block=blocks, head=head))

    refine = []
    cin = num_ctx + 3
    for c, d in [(128, 1), (128, 2), (128, 4), (96, 8), (64, 16), (32, 1)]:
        w, b = _init_conv(nk(), 3, cin, c)
        refine.append((w, b, d, True))
        cin = c
    w, b = _init_conv(nk(), 3, cin, 3, cout_pad=HEAD_PAD)
    refine.append((w, b, 1, False))

    context_up = [_init_transpose_conv_fused(nk(), num_ctx)
                  for _ in range(num_levels)]
    return dict(flow_layers=flow_layers, refine=refine,
                context_up=context_up, num_levels=num_levels)


# ----------------------------------------------------------------------------
# RRNFlow forward.
# ----------------------------------------------------------------------------
def rrn_flow_forward(params, feature_pyramid1, feature_pyramid2):
    alpha = LEAKY_ALPHA
    context_flat = None
    flow = None
    flow_up = None
    context_up = None
    flows = []

    num_levels = len(feature_pyramid1)
    for level in reversed(range(1, num_levels)):
        features1 = feature_pyramid1[level]
        features2 = feature_pyramid2[level]
        B, D, H, W, _ = features1.shape
        spatial = (D, H, W)
        M = D * H * W

        if flow_up is None:
            warped2 = features2
        else:
            warped2 = resample(features2, flow_to_warp(flow_up))

        f1n, w2n = normalize_features([features1, warped2])
        cost_volume = compute_cost_volume(f1n, w2n, max_disp=2)
        cost_volume = jnp.where(cost_volume > 0, cost_volume,
                                alpha * cost_volume)

        if flow_up is None:
            pieces = [cost_volume, features1]
        elif context_up is None:
            # TODO(synk): only reachable when num_channels_upsampled_context==0.
            pieces = [flow_up, cost_volume, features1]
        else:
            pieces = [context_up, flow_up, cost_volume, features1]
        # single bf16 flat concat per level; decoder grows it once per layer
        x_flat = jnp.concatenate(
            [p.reshape(B, M, p.shape[-1]).astype(jnp.bfloat16) for p in pieces],
            axis=-1)

        # one geometry shared by every 3x3x3 / dilation-1 conv at this level
        geom = make_geometry(spatial, ((-1, 0, 1),) * 3)
        x_pad = pad_m(x_flat, geom.pad)

        layer_params = params["flow_layers"][level]
        out = None
        out_pad = None
        for w, b in layer_params["block"]:
            w_sel = select_taps(w, geom.kept)
            out = conv3d_padded(x_pad, w_sel, b, geom, M, alpha=alpha,
                                out_dtype=jnp.bfloat16)
            out_pad = pad_m(out, geom.pad)
            x_pad = jnp.concatenate([x_pad, out_pad], axis=-1)
        context_flat = out                               # (B, M, 32) bf16
        context_pad = out_pad

        wh, bh = layer_params["head"]                    # Cout padded to 128
        flow_flat = conv3d_padded(context_pad, select_taps(wh, geom.kept), bh,
                                  geom, M, alpha=None,
                                  out_dtype=jnp.float32)[..., :3]
        flow = flow_flat.reshape(B, D, H, W, 3)

        if flow_up is not None:                          # accumulate_flow
            flow = flow + flow_up
        flow_up = upsample(flow, is_flow=True)

        wt, bt = params["context_up"][level]             # fused 8-phase weight
        context_up = context_upsample(context_pad, select_taps(wt, geom.kept),
                                      bt, geom, spatial)

        flows.insert(0, flow)

    # dilated-conv refinement at the finest processed level
    B, D, H, W, _ = flow.shape
    spatial = (D, H, W)
    M = D * H * W
    refinement = jnp.concatenate(
        [context_flat, flow.reshape(B, M, 3).astype(jnp.bfloat16)], axis=-1)
    n_ref = len(params["refine"])
    for idx, (w, b, dil, act) in enumerate(params["refine"]):
        geom = make_geometry(spatial, ((-dil, 0, dil),) * 3)
        x_pad = pad_m(refinement, geom.pad)
        w_sel = select_taps(w, geom.kept)
        last = idx == n_ref - 1
        refinement = conv3d_padded(
            x_pad, w_sel, b, geom, M,
            alpha=(alpha if act else None),
            out_dtype=(jnp.float32 if last else jnp.bfloat16))
    refinement = refinement[..., :3].reshape(B, D, H, W, 3)
    refined_flow = flow + refinement
    flows[0] = refined_flow
    flows.insert(0, upsample(flows[0], is_flow=True))
    flows.insert(0, upsample(flows[0], is_flow=True))
    return flows


# ----------------------------------------------------------------------------
if __name__ == "__main__":
    key = jax.random.PRNGKey(0)
    pkey, k1, k2 = jax.random.split(key, 3)
    params = init_params(pkey, num_levels=4)

    B = 2
    chans = [16, 32, 64, 96]                 # per-level feature channels
    spatial = [(8, 8, 8), (4, 4, 4), (2, 2, 2), (1, 1, 1)]
    fp1, fp2 = [], []
    for lvl, (c, (D, H, W)) in enumerate(zip(chans, spatial)):
        fp1.append(jax.random.normal(jax.random.fold_in(k1, lvl),
                                     (B, D, H, W, c), jnp.float32))
        fp2.append(jax.random.normal(jax.random.fold_in(k2, lvl),
                                     (B, D, H, W, c), jnp.float32))

    flows = rrn_flow_forward(params, fp1, fp2)
    flows = jax.block_until_ready(flows)
    assert len(flows) == 5
    assert all(bool(jnp.all(jnp.isfinite(f))) for f in flows)
    print("KERNEL_OK")
</pallas_src>

<mosaic_0001>
module attributes {stable_mosaic.version = 11 : i64} {
  func.func @_conv_tap_kernel(%arg0: i32, %arg1: i32, %arg2: memref<1x1x221xbf16, #tpu.memory_space<vmem>>, %arg3: memref<1x221x128xbf16, #tpu.memory_space<vmem>>, %arg4: memref<1x1xf32, #tpu.memory_space<vmem>>, %arg5: memref<1x128xf32, #tpu.memory_space<vmem>>, %arg6: memref<1x1x128xbf16, #tpu.memory_space<vmem>>) attributes {dimension_semantics = [#tpu.dimension_semantics<parallel>, #tpu.dimension_semantics<parallel>], iteration_bounds = array<i64: 2, 1>, scalar_prefetch = 0 : i64, scratch_operands = 0 : i64, tpu.core_type = #tpu.core_type<tc>, window_params = [{transform_indices = @transform_0, window_bounds = array<i64: 1, 1, 221>}, {pipeline_mode = #tpu.pipeline_mode<synchronous>, transform_indices = @transform_1, window_bounds = array<i64: 1, 221, 128>}, {transform_indices = @transform_2, window_bounds = array<i64: 1, 1>}, {pipeline_mode = #tpu.pipeline_mode<synchronous>, transform_indices = @transform_3, window_bounds = array<i64: 1, 128>}, {transform_indices = @transform_4, window_bounds = array<i64: 1, 1, 128>}]} {
    %cst = arith.constant 0.000000e+00 : f32
    %0 = vector.broadcast %cst : f32 to vector<1x128xf32>
    %c0 = arith.constant 0 : index
    %c0_0 = arith.constant 0 : index
    %c0_1 = arith.constant 0 : index
    %1 = vector.load %arg2[%c0, %c0_0, %c0_1] : memref<1x1x221xbf16, #tpu.memory_space<vmem>>, vector<1x1x221xbf16>
    %2 = vector.shape_cast %1 : vector<1x1x221xbf16> to vector<1x221xbf16>
    %c0_2 = arith.constant 0 : index
    %c0_3 = arith.constant 0 : index
    %c0_4 = arith.constant 0 : index
    %3 = vector.load %arg3[%c0_2, %c0_3, %c0_4] : memref<1x221x128xbf16, #tpu.memory_space<vmem>>, vector<1x221x128xbf16>
    %4 = vector.shape_cast %3 : vector<1x221x128xbf16> to vector<221x128xbf16>
    %cst_5 = arith.constant dense<0.000000e+00> : vector<1x128xf32>
    %5 = tpu.matmul %2, %4, %cst_5 {dimension_numbers = #tpu.dot_dimension_numbers<[1], [0], [0], [1], [0, 0, 1, 1], [], []>} : vector<1x221xbf16>, vector<221x128xbf16>, vector<1x128xf32> -> vector<1x128xf32>
    %6 = arith.addf %0, %5 : vector<1x128xf32>
    %c0_6 = arith.constant 0 : index
    %c0_7 = arith.constant 0 : index
    %7 = vector.load %arg5[%c0_6, %c0_7] : memref<1x128xf32, #tpu.memory_space<vmem>>, vector<1x128xf32>
    %8 = arith.addf %6, %7 : vector<1x128xf32>
    %cst_8 = arith.constant 0.000000e+00 : f32
    %9 = vector.broadcast %cst_8 : f32 to vector<1x128xf32>
    %10 = arith.cmpf ogt, %8, %9 : vector<1x128xf32>
    %cst_9 = arith.constant 5.000000e-02 : f32
    %11 = vector.broadcast %cst_9 : f32 to vector<1x128xf32>
    %12 = arith.mulf %11, %8 : vector<1x128xf32>
    %13 = arith.select %10, %8, %12 : vector<1x128xi1>, vector<1x128xf32>
    %14 = arith.truncf %13 : vector<1x128xf32> to vector<1x128xbf16>
    %c0_10 = arith.constant 0 : index
    %c0_11 = arith.constant 0 : index
    %c0_12 = arith.constant 0 : index
    %15 = vector.load %arg6[%c0_10, %c0_11, %c0_12] : memref<1x1x128xbf16, #tpu.memory_space<vmem>>, vector<1x1x128xbf16>
    %16 = vector.shape_cast %15 : vector<1x1x128xbf16> to vector<1x128xbf16>
    %17 = vector.shape_cast %14 : vector<1x128xbf16> to vector<1x1x128xbf16>
    tpu.vector_store %arg6[%c0_10, %c0_11, %c0_12], %17 {strides = array<i32>} : memref<1x1x128xbf16, #tpu.memory_space<vmem>>, vector<1x1x128xbf16>,
    return
  }
  func.func @transform_0(%arg0: i32, %arg1: i32) -> (i32, i32, i32) {
    %c0_i32 = arith.constant 0 : i32
    %c0_i32_0 = arith.constant 0 : i32
    %c0_i32_1 = arith.constant 0 : i32
    return %arg0, %c0_i32, %c0_i32_0 : i32, i32, i32
  }
  func.func @transform_1(%arg0: i32, %arg1: i32) -> (i32, i32, i32) {
    %c0_i32 = arith.constant 0 : i32
    %c0_i32_0 = arith.constant 0 : i32
    %c0_i32_1 = arith.constant 0 : i32
    %c0_i32_2 = arith.constant 0 : i32
    return %c0_i32, %c0_i32_0, %c0_i32_1 : i32, i32, i32
  }
  func.func @transform_2(%arg0: i32, %arg1: i32) -> (i32, i32) {
    %c0_i32 = arith.constant 0 : i32
    %c0_i32_0 = arith.constant 0 : i32
    return %arg1, %c0_i32 : i32, i32
  }
  func.func @transform_3(%arg0: i32, %arg1: i32) -> (i32, i32) {
    %c0_i32 = arith.constant 0 : i32
    %c0_i32_0 = arith.constant 0 : i32
    %c0_i32_1 = arith.constant 0 : i32
    return %c0_i32, %c0_i32_0 : i32, i32
  }
  func.func @transform_4(%arg0: i32, %arg1: i32) -> (i32, i32, i32) {
    %c0_i32 = arith.constant 0 : i32
    %c0_i32_0 = arith.constant 0 : i32
    return %arg0, %arg1, %c0_i32 : i32, i32, i32
  }
}

</mosaic_0001>

<llo_original>
// kernel: tpu_custom_call.1
$region0: #{tpu_custom_call.1}
  #allocation0 [shape = 'u32[]', space=smem, size = 0x4, offset = 0x4, fixed_abs, tag = 'smem constant byte address 0x4 - core index']
  #allocation1 [shape = 'u32[144,128]{1,0:T(1,128)}', space=vmem, size = 0x12000, scoped, tag = 'internal scratch']
  #allocation2 [shape = 'f32[1,1]{1,0:T(1,128)S(1)}', space=vmem, size = 0x200, scoped, tag = 'scoped memory for tpu_custom_call.1']
  %s0 = inlined_call_operand.vmem [shape: bf16[2,1,221], index: 0, kind: input, shape index: {}]
  %s1 = inlined_call_operand.hbm [shape: bf16[1,221,128], index: 1, kind: input, shape index: {}]
  %s2 = inlined_call_operand.<no memory space> [shape: f32[1,1], index: 2, kind: input, shape index: {}]
  %s3 = inlined_call_operand.vmem [shape: f32[1,128], index: 3, kind: input, shape index: {}]
  %s4 = inlined_call_operand.vmem [shape: bf16[2,1,128], index: 4, kind: output, shape index: {}]
  %s5 = sld [smem:[#allocation0]]
  $region53: #{tpu_custom_call.1} parent=0
    _
  %s7 = ssub.s32 1, %s5
  %s8 = scalar_select 0, %s7, %s5
  %v9 = vstv %s2
  %10 = vst [vmem:[#allocation2] sm:$0x1] %v9
  $region1: #{tpu_custom_call.1} parent=0
    #allocation3 [shape = 'u8[57344]{0}', space=vmem, size = 0xe000, scoped, tag = 'input window, operand 1, single buffered']
    #allocation4 [shape = 's32[2]{0}', space=sflag, size = 0x8, scoped, tag = 'scoped memory for tpu_custom_call.1']
    %11 = vsyncpa [#allocation4], 0
    loop: start=0, step=1, limit=4
    $region2: #{tpu_custom_call.1} parent=1 // loop_pre_header
      _
    $region3: #{tpu_custom_call.1} parent=1 // loop_header
      %s13 = sphi 0, %s17
      %p14 = scmp.ge.s32.totalorder %s13, 4
      %s20 = sphi 0, %s32
      %s21 = sphi 0, %s28
      %s22 = sphi 0, %s20
      %s23 = sphi 0, %s21
      %s24 = sphi 0, %s22
      %s25 = sphi 0, %s23
      %s35 = sphi 0, %s37
      %s38 = sphi 0, %s35
      %s39 = sphi 0, %s38
      %s55 = sphi 0, %s39
      %s59 = sphi 0, %s59
      %s61 = sphi 0, %s59
      %s62 = sphi 0, %s61
      %s76 = sphi 0, %s62
      %s82 = sphi 0, %s84
      %s85 = sphi 0, %s82
      %s86 = sphi 0, %s85
      %s102 = sphi 0, %s86
      %s106 = sphi 0, %s106
      %s108 = sphi 0, %s106
      %s109 = sphi 0, %s108
      %s123 = sphi 0, %s109
      %s131 = sphi 0, %s133
      %s134 = sphi 0, %s131
      %s135 = sphi 0, %s134
      %s151 = sphi 0, %s135
    $region4: #{tpu_custom_call.1} parent=1 // loop_header_branch
      %16 = sbr.rel (%p14) target = $region8
    $region5: #{tpu_custom_call.1} parent=1 // loop_body
      %s18 = ssub.s32 %s13, 1
      %s19 = ssub.s32 %s13, 2
      %s26 = sadd.s32 1, %s21
      %p27 = scmp.ge.s32.totalorder %s26, 1
      %s28 = scalar_select %p27, 0, %s26
      %s29 = sadd.s32 1, %s20
      %s30 = scalar_select %p27, %s29, %s20
      %p31 = scmp.ge.s32.totalorder %s30, 2
      %s32 = scalar_select %p31, 0, %s30
      %s33 = ssub.s32 %s20, %s32
      %p34 = scmp.eq.s32.totalorder %s33, 0
      %s36 = sadd.s32 %s35, 1
      %s37 = scalar_select %p34, %s35, %s36
      %p40 = pneg %p34
      %p41 = scmp.eq.s32.totalorder %s13, 1
      %p42 = por %p40, %p41
      %p43 = scmp.ne.s32.totalorder %s35, %s38
      %p44 = scmp.eq.s32.totalorder %s13, 0
      %p45 = por %p43, %p44
      %p46 = scmp.ne.s32.totalorder %s35, %s38
      %p47 = scmp.eq.s32.totalorder %s18, 1
      %p48 = por %p46, %p47
      %p49 = scmp.ne.s32.totalorder %s38, %s39
      %p50 = scmp.eq.s32.totalorder %s18, 0
      %p51 = por %p49, %p50
      %p52 = scmp.ne.s32.totalorder %s38, %s39
      %p53 = scmp.eq.s32.totalorder %s19, 1
      %p54 = por %p52, %p53
      %p56 = scmp.ne.s32.totalorder %s39, %s55
      %p57 = scmp.eq.s32.totalorder %s19, 0
      %p58 = por %p56, %p57
      %s60 = sadd.s32 %s59, 1
      %p63 = scmp.eq.s32.totalorder %s13, 1
      %p64 = scmp.ne.s32.totalorder %s59, %s61
      %p65 = scmp.eq.s32.totalorder %s13, 0
      %p66 = por %p64, %p65
      %p67 = scmp.ne.s32.totalorder %s59, %s61
      %p68 = scmp.eq.s32.totalorder %s18, 1
      %p69 = por %p67, %p68
      %p70 = scmp.ne.s32.totalorder %s61, %s62
      %p71 = scmp.eq.s32.totalorder %s18, 0
      %p72 = por %p70, %p71
      %p73 = scmp.ne.s32.totalorder %s61, %s62
      %p74 = scmp.eq.s32.totalorder %s19, 1
      %p75 = por %p73, %p74
      %p77 = scmp.ne.s32.totalorder %s62, %s76
      %p78 = scmp.eq.s32.totalorder %s19, 0
      %p79 = por %p77, %p78
      %s80 = ssub.s32 %s21, %s28
      %p81 = scmp.eq.s32.totalorder %s80, 0
      %s83 = sadd.s32 %s82, 1
      %s84 = scalar_select %p81, %s82, %s83
      %p87 = pneg %p81
      %p88 = scmp.eq.s32.totalorder %s13, 1
      %p89 = por %p87, %p88
      %p90 = scmp.ne.s32.totalorder %s82, %s85
      %p91 = scmp.eq.s32.totalorder %s13, 0
      %p92 = por %p90, %p91
      %p93 = scmp.ne.s32.totalorder %s82, %s85
      %p94 = scmp.eq.s32.totalorder %s18, 1
      %p95 = por %p93, %p94
      %p96 = scmp.ne.s32.totalorder %s85, %s86
      %p97 = scmp.eq.s32.totalorder %s18, 0
      %p98 = por %p96, %p97
      %p99 = scmp.ne.s32.totalorder %s85, %s86
      %p100 = scmp.eq.s32.totalorder %s19, 1
      %p101 = por %p99, %p100
      %p103 = scmp.ne.s32.totalorder %s86, %s102
      %p104 = scmp.eq.s32.totalorder %s19, 0
      %p105 = por %p103, %p104
      %s107 = sadd.s32 %s106, 1
      %p110 = scmp.eq.s32.totalorder %s13, 1
      %p111 = scmp.ne.s32.totalorder %s106, %s108
      %p112 = scmp.eq.s32.totalorder %s13, 0
      %p113 = por %p111, %p112
      %p114 = scmp.ne.s32.totalorder %s106, %s108
      %p115 = scmp.eq.s32.totalorder %s18, 1
      %p116 = por %p114, %p115
      %p117 = scmp.ne.s32.totalorder %s108, %s109
      %p118 = scmp.eq.s32.totalorder %s18, 0
      %p119 = por %p117, %p118
      %p120 = scmp.ne.s32.totalorder %s108, %s109
      %p121 = scmp.eq.s32.totalorder %s19, 1
      %p122 = por %p120, %p121
      %p124 = scmp.ne.s32.totalorder %s109, %s123
      %p125 = scmp.eq.s32.totalorder %s19, 0
      %p126 = por %p124, %p125
      %s127 = ssub.s32 %s20, %s32
      %s128 = ssub.s32 %s21, %s28
      %s129 = sor.u32 %s127, %s128
      %p130 = scmp.eq.s32.totalorder %s129, 0
      %s132 = sadd.s32 %s131, 1
      %s133 = scalar_select %p130, %s131, %s132
      %p136 = pneg %p130
      %p137 = scmp.eq.s32.totalorder %s13, 1
      %p138 = por %p136, %p137
      %p139 = scmp.ne.s32.totalorder %s131, %s134
      %p140 = scmp.eq.s32.totalorder %s13, 0
      %p141 = por %p139, %p140
      %p142 = scmp.ne.s32.totalorder %s131, %s134
      %p143 = scmp.eq.s32.totalorder %s18, 1
      %p144 = por %p142, %p143
      %p145 = scmp.ne.s32.totalorder %s134, %s135
      %p146 = scmp.eq.s32.totalorder %s18, 0
      %p147 = por %p145, %p146
      %p148 = scmp.ne.s32.totalorder %s134, %s135
      %p149 = scmp.eq.s32.totalorder %s19, 1
      %p150 = por %p148, %p149
      %p152 = scmp.ne.s32.totalorder %s135, %s151
      %p153 = scmp.eq.s32.totalorder %s19, 0
      %p154 = por %p152, %p153
      %p155 = scmp.le.s32.totalorder 1, %s13
      %p156 = scmp.lt.s32.totalorder %s13, 3
      %p157 = pnand %p155, %p156
      %p158 = pneg %p157
      // Predicated region
      $region9: #{tpu_custom_call.1} parent=5 // pred_check
        _
      $region10: #{tpu_custom_call.1} parent=5 // pred_check_branch
        %160 = sbr.rel (%p157) target = $region12
      $region11: #{tpu_custom_call.1} parent=5 // pred_region
        %s161 = ssub.s32 %s13, 1
        // Predicated region
        $region13: #{tpu_custom_call.1} parent=11 // pred_check
          %p162 = pneg %p72
        $region14: #{tpu_custom_call.1} parent=11 // pred_check_branch
          %164 = sbr.rel (%p162) target = $region16
        $region15: #{tpu_custom_call.1} parent=11 // pred_region
          %s166 = ssub.s32 1792, 1792
          %167 = vsyncadd [#allocation4], %s166
          %s168 = sshll.u32 [#allocation3], 4
          %s169 = int_to_ptr.vmem [resolvable:$true] %s168
          %174 = dma.hbm_to_vmem [thread:$0]  %s1, 1792, %s169, [#allocation4], 64, 64, 4
        $region16: #{tpu_custom_call.1} parent=11 // pred_fallthru
          _
        // Predicated region
        $region17: #{tpu_custom_call.1} parent=11 // pred_check
          %p175 = pneg %p98
        $region18: #{tpu_custom_call.1} parent=11 // pred_check_branch
          %177 = sbr.rel (%p175) target = $region20
        $region19: #{tpu_custom_call.1} parent=11 // pred_region
          %p178 = scmp.lt.s32.totalorder %s23, 0
          %s179 = scalar_select %p178, %s23, 0
          %s180 = scalar_lea.vmem [#allocation2], %s179
        $region20: #{tpu_custom_call.1} parent=11 // pred_fallthru
          _
        // Predicated region
        $region21: #{tpu_custom_call.1} parent=11 // pred_check
          %p181 = pneg %p119
        $region22: #{tpu_custom_call.1} parent=11 // pred_check_branch
          %183 = sbr.rel (%p181) target = $region24
        $region23: #{tpu_custom_call.1} parent=11 // pred_region
          _
        $region24: #{tpu_custom_call.1} parent=11 // pred_fallthru
          _
      $region12: #{tpu_custom_call.1} parent=5 // pred_fallthru
        _
      %p184 = scmp.lt.s32.totalorder %s13, 2
      // Predicated region
      $region25: #{tpu_custom_call.1} parent=5 // pred_check
        %p185 = pneg %p184
      $region26: #{tpu_custom_call.1} parent=5 // pred_check_branch
        %187 = sbr.rel (%p185) target = $region28
      $region27: #{tpu_custom_call.1} parent=5 // pred_region
        // Predicated region
        $region29: #{tpu_custom_call.1} parent=27 // pred_check
          %p188 = pneg %p45
        $region30: #{tpu_custom_call.1} parent=27 // pred_check_branch
          %190 = sbr.rel (%p188) target = $region32
        $region31: #{tpu_custom_call.1} parent=27 // pred_region
          %p191 = scmp.lt.s32.totalorder %s20, 1
          %s192 = scalar_select %p191, %s20, 1
          %s193 = smul.addr %s192, 2
          %s194 = scalar_lea.vmem %s0, %s193
        $region32: #{tpu_custom_call.1} parent=27 // pred_fallthru
          _
      $region28: #{tpu_custom_call.1} parent=5 // pred_fallthru
        _
      %p195 = scmp.le.s32.totalorder 1, %s13
      %p196 = scmp.lt.s32.totalorder %s13, 3
      %p197 = pnand %p195, %p196
      %p198 = pneg %p197
      // Predicated region
      $region33: #{tpu_custom_call.1} parent=5 // pred_check
        _
      $region34: #{tpu_custom_call.1} parent=5 // pred_check_branch
        %200 = sbr.rel (%p197) target = $region36
      $region35: #{tpu_custom_call.1} parent=5 // pred_region
        %s201 = ssub.s32 %s13, 1
        // Predicated region
        $region37: #{tpu_custom_call.1} parent=35 // pred_check
          %p202 = pneg %p72
        $region38: #{tpu_custom_call.1} parent=35 // pred_check_branch
          %204 = sbr.rel (%p202) target = $region40
        $region39: #{tpu_custom_call.1} parent=35 // pred_region
          %205 = dma.done [#allocation4], 1792
        $region40: #{tpu_custom_call.1} parent=35 // pred_fallthru
          _
        %p206 = scmp.lt.s32.totalorder %s22, 1
        %s207 = scalar_select %p206, %s22, 1
        %s208 = smul.addr %s207, 2
        %s209 = scalar_lea.vmem %s0, %s208
        %p210 = pneg %p51
        %p211 = pneg %p48
        %p212 = pneg %p72
        %p213 = pneg %p69
        %p214 = scmp.lt.s32.totalorder %s23, 0
        %s215 = scalar_select %p214, %s23, 0
        %s216 = scalar_lea.vmem [#allocation2], %s215
        %p217 = pneg %p98
        %p218 = pneg %p95
        %p219 = pneg %p119
        %p220 = pneg %p116
        %p221 = pneg %p147
        %p222 = pneg %p144
        %p223 = scmp.lt.s32.totalorder %s22, 1
        %s224 = scalar_select %p223, %s22, 1
        %p225 = scmp.lt.s32.totalorder %s23, 0
        %s226 = scalar_select %p225, %s23, 0
        %s227 = sadd.s32 %s226, %s224
        %s228 = scalar_lea.vmem %s4, %s227
        %p229 = scmp.lt.s32.totalorder %s22, 1
        %s230 = scalar_select %p229, %s22, 1
        %s231 = smul.addr %s230, 2
        %s232 = scalar_lea.vmem %s0, %s231
        %p233 = scmp.lt.s32.totalorder %s23, 0
        %s234 = scalar_select %p233, %s23, 0
        %s235 = scalar_lea.vmem [#allocation2], %s234
        %p236 = scmp.lt.s32.totalorder %s22, 1
        %s237 = scalar_select %p236, %s22, 1
        %p238 = scmp.lt.s32.totalorder %s23, 0
        %s239 = scalar_select %p238, %s23, 0
        %s240 = sadd.s32 %s239, %s237
        %s241 = scalar_lea.vmem %s4, %s240
        %v243 = vld [vmem:[%s232] sm:$0x3]
        %v244 = vld [vmem:[#allocation3] sm:$0xf]
        %v245 = vld [vmem:[#allocation3 + $0x4] sm:$0xf]
        %v246 = vld [vmem:[#allocation3 + $0x8] sm:$0xf]
        %v247 = vld [vmem:[#allocation3 + $0xc] sm:$0xf]
        %v248 = vld [vmem:[#allocation3 + $0x10] sm:$0xf]
        %v249 = vld [vmem:[#allocation3 + $0x14] sm:$0xf]
        %v250 = vld [vmem:[#allocation3 + $0x18] sm:$0xf]
        %v251 = vld [vmem:[#allocation3 + $0x1c] sm:$0xf]
        %v252 = vld [vmem:[#allocation3 + $0x20] sm:$0xf]
        %v253 = vld [vmem:[#allocation3 + $0x24] sm:$0xf]
        %v254 = vld [vmem:[#allocation3 + $0x28] sm:$0xf]
        %v255 = vld [vmem:[#allocation3 + $0x2c] sm:$0xf]
        %v256 = vld [vmem:[#allocation3 + $0x30] sm:$0xf]
        %v257 = vld [vmem:[#allocation3 + $0x34] sm:$0xf]
        %v258 = vld [vmem:[#allocation3 + $0x38] sm:$0xf]
        %v259 = vld [vmem:[#allocation3 + $0x3c] sm:$0xf]
        %v260 = vld [vmem:[#allocation3 + $0x40] sm:$0xf]
        %v261 = vld [vmem:[#allocation3 + $0x44] sm:$0xf]
        %v262 = vld [vmem:[#allocation3 + $0x48] sm:$0xf]
        %v263 = vld [vmem:[#allocation3 + $0x4c] sm:$0xf]
        %v264 = vld [vmem:[#allocation3 + $0x50] sm:$0xf]
        %v265 = vld [vmem:[#allocation3 + $0x54] sm:$0xf]
        %v266 = vld [vmem:[#allocation3 + $0x58] sm:$0xf]
        %v267 = vld [vmem:[#allocation3 + $0x5c] sm:$0xf]
        %v268 = vld [vmem:[#allocation3 + $0x60] sm:$0xf]
        %v269 = vld [vmem:[#allocation3 + $0x64] sm:$0xf]
        %v270 = vld [vmem:[#allocation3 + $0x68] sm:$0xf]
        %v271 = vld [vmem:[#allocation3 + $0x6c] sm:$0x7]
        %v272 = vld [vmem:[%s3] sm:$0x1]
        %v275 = vunpack.c.l.s4 1966171168
        %v276 = vunpack.c.0.s8 %v275
        %v277 = vlaneseq
        %v278 = vshrl.u32 %v277, 7
        %v279 = vsub.s32 %v276, %v278
        %v280 = vrot.slane %v243, %v279
        %v281 = vcombine.high %v280, %v280
        %v283 = vunpack.c.l.s4 1966171168
        %v284 = vunpack.c.0.s8 %v283
        %v285 = vlaneseq
        %v286 = vshrl.u32 %v285, 7
        %v287 = vsub.s32 %v284, %v286
        %v288 = vrot.slane %v280, %v287
        %v290 = vunpack.c.l.s4 1966171168
        %v291 = vunpack.c.0.s8 %v290
        %v292 = vlaneseq
        %v293 = vshrl.u32 %v292, 7
        %v294 = vsub.s32 %v291, %v293
        %v295 = vrot.slane %v281, %v294
        %v325 = vunpack.c.l.b16 %v244
        %v326 = vunpack.c.l.b16 %v245
        %v327 = vunpack.c.l.b16 %v246
        %v328 = vunpack.c.l.b16 %v247
        %v329 = vunpack.c.l.b16 %v248
        %v330 = vunpack.c.l.b16 %v249
        %v331 = vunpack.c.l.b16 %v250
        %v332 = vunpack.c.l.b16 %v251
        %v333 = vunpack.c.l.b16 %v252
        %v334 = vunpack.c.l.b16 %v253
        %v335 = vunpack.c.l.b16 %v254
        %v336 = vunpack.c.l.b16 %v255
        %v337 = vunpack.c.l.b16 %v256
        %v338 = vunpack.c.l.b16 %v257
        %v339 = vunpack.c.l.b16 %v258
        %v340 = vunpack.c.l.b16 %v259
        %v341 = vunpack.c.l.b16 %v260
        %v342 = vunpack.c.l.b16 %v261
        %v343 = vunpack.c.l.b16 %v262
        %v344 = vunpack.c.l.b16 %v263
        %v345 = vunpack.c.l.b16 %v264
        %v346 = vunpack.c.l.b16 %v265
        %v347 = vunpack.c.l.b16 %v266
        %v348 = vunpack.c.l.b16 %v267
        %v349 = vunpack.c.l.b16 %v268
        %v350 = vunpack.c.l.b16 %v269
        %v351 = vunpack.c.l.b16 %v270
        %v352 = vunpack.c.l.b16 %v271
        %v353 = vpack.c.b16 %v326, %v325
        %v354 = vpack.c.b16 %v328, %v327
        %v355 = vpack.c.b16 %v330, %v329
        %v356 = vpack.c.b16 %v332, %v331
        %v357 = vpack.c.b16 %v334, %v333
        %v358 = vpack.c.b16 %v336, %v335
        %v359 = vpack.c.b16 %v338, %v337
        %v360 = vpack.c.b16 %v340, %v339
        %v361 = vpack.c.b16 %v342, %v341
        %v362 = vpack.c.b16 %v344, %v343
        %v363 = vpack.c.b16 %v346, %v345
        %v364 = vpack.c.b16 %v348, %v347
        %v365 = vpack.c.b16 %v350, %v349
        %v366 = vpack.c.b16 %v352, %v351
        %vm380 = vcmask 760832
        %v382 = vsel %vm380, %v295, 0
        %vm384 = vcmask 1045504
        %vm385 = vcmask 1046528
        %v386 = vsel %vm384, 4294967295, 65535
        %v387 = vsel %vm385, %v386, 0
        %v389 = vand.u32 %v366, %v387
        %391 = vmatprep.subr.bf16.mxu0 0
        %392 = vmatpush1.bf16.msra.mxu0 %v353
        %393 = vmatprep.subr.bf16.mxu0 0
        %394 = vmatpush1.bf16.msra.mxu0 %v354
        %395 = vmatprep.subr.bf16.mxu0 0
        %396 = vmatpush1.bf16.msra.mxu0 %v355
        %397 = vmatprep.subr.bf16.mxu0 0
        %398 = vmatpush1.bf16.msra.mxu0 %v356
        %399 = vmatprep.subr.bf16.mxu0 0
        %400 = vmatpush1.bf16.msra.mxu0 %v357
        %401 = vmatprep.subr.bf16.mxu0 0
        %402 = vmatpush1.bf16.msra.mxu0 %v358
        %403 = vmatprep.subr.bf16.mxu0 0
        %404 = vmatpush1.bf16.msra.mxu0 %v359
        %405 = vmatprep.subr.bf16.mxu0 0
        %406 = vmatpush1.bf16.msra.mxu0 %v360
        %407 = vmatprep.subr.bf16.mxu0 0
        %408 = vmatpush1.bf16.msra.mxu0 %v361
        %409 = vmatprep.subr.bf16.mxu0 0
        %410 = vmatpush1.bf16.msra.mxu0 %v362
        %411 = vmatprep.subr.bf16.mxu0 0
        %412 = vmatpush1.bf16.msra.mxu0 %v363
        %413 = vmatprep.subr.bf16.mxu0 0
        %414 = vmatpush1.bf16.msra.mxu0 %v364
        %415 = vmatprep.subr.bf16.mxu0 0
        %416 = vmatpush1.bf16.msra.mxu0 %v365
        %417 = vmatprep.subr.bf16.mxu0 0
        %418 = vmatpush1.bf16.msra.mxu0 %v389
        %419 = vmatprep.subr.bf16.mxu0 0
        %420 = vmatpush1.bf16.msra.mxu0 0
        %421 = vmatprep.subr.bf16.mxu0 0
        %422 = vmatpush1.bf16.msra.mxu0 0
        %423 = vmatprep.mubr.bf16.mxu0 %v382
        %424 = vmatmul.mubr.bf16.gmra.mrb[0].mxu0 %v288
        %v425 = vpop.f32.mrb[0].mxu0
        %v426 = vadd.f32 %v272, %v425
        %v427 = vpop.f32.mrb[0].mxu0
        %v428 = vpop.f32.mrb[0].mxu0
        %v429 = vpop.f32.mrb[0].mxu0
        %430 = vdwg.mxu0
        %vm431 = vcmp.gt.f32.partialorder %v426, 0.0
        %v432 = vmul.f32 %v426, 0.05
        %v433 = vsel %vm431, %v426, %v432
        %v434 = vpack.c.bf16 %v433, %v433
        %vm435 = vcmask 1040384
        %vm436 = vsmask.f32 256
        %vm437 = vmand %vm435, %vm436
        %v438 = vld [vmem:[%s241] sm:$0x1]
        %v439 = vsel %vm437, %v434, %v438
        %440 = vst [vmem:[%s241] sm:$0x1] %v439
        %p441 = scmp.lt.s32.totalorder %s22, 1
        %s442 = scalar_select %p441, %s22, 1
        %p443 = scmp.lt.s32.totalorder %s23, 0
        %s444 = scalar_select %p443, %s23, 0
        %s445 = sadd.s32 %s444, %s442
        %s446 = scalar_lea.vmem %s4, %s445
        // Predicated region
        $region41: #{tpu_custom_call.1} parent=35 // pred_check
          %p447 = pneg %p144
        $region42: #{tpu_custom_call.1} parent=35 // pred_check_branch
          %449 = sbr.rel (%p447) target = $region44
        $region43: #{tpu_custom_call.1} parent=35 // pred_region
          _
        $region44: #{tpu_custom_call.1} parent=35 // pred_fallthru
          _
      $region36: #{tpu_custom_call.1} parent=5 // pred_fallthru
        _
      %p450 = scmp.le.s32.totalorder 2, %s13
      // Predicated region
      $region45: #{tpu_custom_call.1} parent=5 // pred_check
        %p451 = pneg %p450
      $region46: #{tpu_custom_call.1} parent=5 // pred_check_branch
        %453 = sbr.rel (%p451) target = $region48
      $region47: #{tpu_custom_call.1} parent=5 // pred_region
        %s454 = ssub.s32 %s13, 2
        // Predicated region
        $region49: #{tpu_custom_call.1} parent=47 // pred_check
          %p455 = pneg %p150
        $region50: #{tpu_custom_call.1} parent=47 // pred_check_branch
          %457 = sbr.rel (%p455) target = $region52
        $region51: #{tpu_custom_call.1} parent=47 // pred_region
          %p458 = scmp.lt.s32.totalorder %s24, 1
          %s459 = scalar_select %p458, %s24, 1
          %p460 = scmp.lt.s32.totalorder %s25, 0
          %s461 = scalar_select %p460, %s25, 0
          %s462 = sadd.s32 %s461, %s459
          %s463 = scalar_lea.vmem %s4, %s462
        $region52: #{tpu_custom_call.1} parent=47 // pred_fallthru
          _
      $region48: #{tpu_custom_call.1} parent=5 // pred_fallthru
        _
    $region6: #{tpu_custom_call.1} parent=1 // loop_footer
      %s17 = sadd.s32 1, %s13
    $region7: #{tpu_custom_call.1} parent=1 // loop_footer_branch
      %12 = sbr.rel target = $region3
    $region8: #{tpu_custom_call.1} parent=1 // loop_exit
      _
    %464 = vsyncpa [#allocation4], 1
    %s465 = scalar_lea.sflag [#allocation4], 1
    %466 = vsyncpa %s465, 1

</llo_original>
